<compile_context>
chip_gen: v7x
topology: tpu7x:2x2x1
jax: 0.10.0
libtpu: 0.0.40
codegen_flags: <defaults>
</compile_context>

<pallas_src>
import jax
import jax.numpy as jnp
from jax.experimental import pallas as pl
from jax.experimental.pallas import tpu as pltpu

IN_FEATURES = 3
OUT_FEATURES = 2


def linear_kernel(x_ref, wb_ref, o_ref):
    # x_ref:  (B, IN)        activations
    # wb_ref: (IN + 1, OUT)  rows 0..IN-1 = W^T, row IN = bias
    # o_ref:  (B, OUT)
    x = x_ref[...]
    wb = wb_ref[...]

    # Unrolled VPU contraction: y = sum_k x[:, k:k+1] * W^T[k:k+1, :] + b
    # (B,1) * (1,OUT) broadcasts -> 3 fused mul-adds on the VALU, no MXU.
    y = wb[IN_FEATURES:IN_FEATURES + 1, :]  # bias row, broadcast over B
    for k in range(IN_FEATURES):            # static unroll, IN = 3
        y = y + x[:, k:k + 1] * wb[k:k + 1, :]

    o_ref[...] = y.astype(o_ref.dtype)


def linear_forward(x, weight, bias):
    """y = x @ weight.T + bias  (PyTorch Linear semantics).

    weight: (OUT, IN), bias: (OUT,), x: (B, IN).
    """
    B, in_f = x.shape
    out_f, _ = weight.shape
    # Pack pre-transposed weight and bias into a single VMEM operand:
    # one DMA descriptor instead of two, and rows already index K.
    wb = jnp.concatenate(
        [weight.T.astype(jnp.float32), bias.reshape(1, out_f).astype(jnp.float32)],
        axis=0,
    )  # (IN + 1, OUT)

    return pl.pallas_call(
        linear_kernel,
        out_shape=jax.ShapeDtypeStruct((B, out_f), x.dtype),
        in_specs=[
            pl.BlockSpec(memory_space=pltpu.MemorySpace.VMEM),
            pl.BlockSpec(memory_space=pltpu.MemorySpace.VMEM),
        ],
        out_specs=pl.BlockSpec(memory_space=pltpu.MemorySpace.VMEM),
    )(x, wb)


if __name__ == "__main__":
    key = jax.random.PRNGKey(0)
    k_x, k_w, k_b = jax.random.split(key, 3)

    B, IN, OUT = 4, IN_FEATURES, OUT_FEATURES

    # Deterministic parameter init (PyTorch-style uniform in +/- 1/sqrt(IN))
    bound = 1.0 / (IN ** 0.5)
    weight = jax.random.uniform(k_w, (OUT, IN), jnp.float32, -bound, bound)
    bias = jax.random.uniform(k_b, (OUT,), jnp.float32, -bound, bound)

    x = jax.random.normal(k_x, (B, IN), jnp.float32)

    out = linear_forward(x, weight, bias)
    out = jax.block_until_ready(out)

    # Reference check in plain JAX
    ref = x @ weight.T + bias
    assert out.shape == (B, OUT)
    assert jnp.allclose(out, ref, atol=1e-5, rtol=1e-5)

    print("KERNEL_OK")
</pallas_src>

<mosaic_0001>
module attributes {stable_mosaic.version = 11 : i64} {
  func.func @linear_kernel(%arg0: memref<4x3xf32, #tpu.memory_space<vmem>>, %arg1: memref<4x2xf32, #tpu.memory_space<vmem>>, %arg2: memref<4x2xf32, #tpu.memory_space<vmem>>) attributes {dimension_semantics = [], scalar_prefetch = 0 : i64, scratch_operands = 0 : i64, tpu.core_type = #tpu.core_type<tc>} {
    %c0 = arith.constant 0 : index
    %c0_0 = arith.constant 0 : index
    %0 = vector.load %arg0[%c0, %c0_0] : memref<4x3xf32, #tpu.memory_space<vmem>>, vector<4x3xf32>
    %c0_1 = arith.constant 0 : index
    %c0_2 = arith.constant 0 : index
    %1 = vector.load %arg1[%c0_1, %c0_2] : memref<4x2xf32, #tpu.memory_space<vmem>>, vector<4x2xf32>
    %2 = vector.extract_strided_slice %1 {offsets = [3, 0], sizes = [1, 2], strides = [1, 1]} : vector<4x2xf32> to vector<1x2xf32>
    %3 = vector.extract_strided_slice %0 {offsets = [0, 0], sizes = [4, 1], strides = [1, 1]} : vector<4x3xf32> to vector<4x1xf32>
    %4 = vector.extract_strided_slice %1 {offsets = [0, 0], sizes = [1, 2], strides = [1, 1]} : vector<4x2xf32> to vector<1x2xf32>
    %5 = vector.broadcast %3 : vector<4x1xf32> to vector<4x2xf32>
    %6 = vector.broadcast %4 : vector<1x2xf32> to vector<4x2xf32>
    %7 = arith.mulf %5, %6 : vector<4x2xf32>
    %8 = vector.broadcast %2 : vector<1x2xf32> to vector<4x2xf32>
    %9 = arith.addf %8, %7 : vector<4x2xf32>
    %10 = vector.extract_strided_slice %0 {offsets = [0, 1], sizes = [4, 1], strides = [1, 1]} : vector<4x3xf32> to vector<4x1xf32>
    %11 = vector.extract_strided_slice %1 {offsets = [1, 0], sizes = [1, 2], strides = [1, 1]} : vector<4x2xf32> to vector<1x2xf32>
    %12 = vector.broadcast %10 : vector<4x1xf32> to vector<4x2xf32>
    %13 = vector.broadcast %11 : vector<1x2xf32> to vector<4x2xf32>
    %14 = arith.mulf %12, %13 : vector<4x2xf32>
    %15 = arith.addf %9, %14 : vector<4x2xf32>
    %16 = vector.extract_strided_slice %0 {offsets = [0, 2], sizes = [4, 1], strides = [1, 1]} : vector<4x3xf32> to vector<4x1xf32>
    %17 = vector.extract_strided_slice %1 {offsets = [2, 0], sizes = [1, 2], strides = [1, 1]} : vector<4x2xf32> to vector<1x2xf32>
    %18 = vector.broadcast %16 : vector<4x1xf32> to vector<4x2xf32>
    %19 = vector.broadcast %17 : vector<1x2xf32> to vector<4x2xf32>
    %20 = arith.mulf %18, %19 : vector<4x2xf32>
    %21 = arith.addf %15, %20 : vector<4x2xf32>
    %c0_3 = arith.constant 0 : index
    %c0_4 = arith.constant 0 : index
    %22 = vector.load %arg2[%c0_3, %c0_4] : memref<4x2xf32, #tpu.memory_space<vmem>>, vector<4x2xf32>
    tpu.vector_store %arg2[%c0_3, %c0_4], %21 {strides = array<i32>} : memref<4x2xf32, #tpu.memory_space<vmem>>, vector<4x2xf32>,
    return
  }
}

</mosaic_0001>

<llo_original>
// kernel: tpu_custom_call.1
$region0: #{tpu_custom_call.1}
  #allocation0 [shape = 'u32[]', space=smem, size = 0x4, offset = 0x4, fixed_abs, tag = 'smem constant byte address 0x4 - core index']
  #allocation1 [shape = 'u32[144,128]{1,0:T(1,128)}', space=vmem, size = 0x12000, scoped, tag = 'internal scratch']
  %s0 = inlined_call_operand.vmem [shape: f32[4,3], index: 0, kind: input, shape index: {}]
  %s1 = inlined_call_operand.vmem [shape: f32[4,2], index: 1, kind: input, shape index: {}]
  %s2 = inlined_call_operand.vmem [shape: f32[4,2], index: 2, kind: output, shape index: {}]
  %s3 = sld [smem:[#allocation0]]
  $region18: #{tpu_custom_call.1} parent=0
    _
  %s5 = ssub.s32 1, %s3
  %s6 = scalar_select 0, %s5, %s3
  // Predicated region
  $region2: #{tpu_custom_call.1} parent=0 // pred_check
    _
  $region3: #{tpu_custom_call.1} parent=0 // pred_check_branch
    %8 = sbr.rel (0) target = $region5
  $region4: #{tpu_custom_call.1} parent=0 // pred_region
    _
  $region5: #{tpu_custom_call.1} parent=0 // pred_fallthru
    _
  // Predicated region
  $region6: #{tpu_custom_call.1} parent=0 // pred_check
    _
  $region7: #{tpu_custom_call.1} parent=0 // pred_check_branch
    %10 = sbr.rel (0) target = $region9
  $region8: #{tpu_custom_call.1} parent=0 // pred_region
    _
  $region9: #{tpu_custom_call.1} parent=0 // pred_fallthru
    _
  %v11 = vld [vmem:[%s0] sm:$0xf]
  %v12 = vld [vmem:[%s1] sm:$0xf]
  %14 = vset.pattern.permute.xlu0 0
  %15 = vperm.xlu0 %14, %v11
  %v16 = vpop.permute.xlu0 %15
  %v18 = vlaneseq
  %v19 = vshrl.u32 %v18, 7
  %v20 = vsub.s32 0, %v19
  %v21 = vrot.slane %v12, %v20
  %v22 = vmul.f32 %v16, %v21
  %v23 = vlaneseq
  %v24 = vshrl.u32 %v23, 7
  %v25 = vsub.s32 3, %v24
  %v26 = vrot.slane %v12, %v25
  %v27 = vadd.f32 %v26, %v22
  %28 = vset.pattern.permute.xlu0 1
  %29 = vperm.xlu0 %28, %v11
  %v30 = vpop.permute.xlu0 %29
  %v32 = vlaneseq
  %v33 = vshrl.u32 %v32, 7
  %v34 = vsub.s32 1, %v33
  %v35 = vrot.slane %v12, %v34
  %v36 = vmul.f32 %v30, %v35
  %v37 = vadd.f32 %v27, %v36
  %38 = vset.pattern.permute.xlu0 2
  %39 = vperm.xlu0 %38, %v11
  %v40 = vpop.permute.xlu0 %39
  %v42 = vlaneseq
  %v43 = vshrl.u32 %v42, 7
  %v44 = vsub.s32 2, %v43
  %v45 = vrot.slane %v12, %v44
  %v46 = vmul.f32 %v40, %v45
  %v47 = vadd.f32 %v37, %v46
  %vm48 = vcmask 11264
  %49 = vst.msk [vmem:[%s2] sm:$0xf] %vm48, %v47
  // Predicated region
  $region10: #{tpu_custom_call.1} parent=0 // pred_check
    _
  $region11: #{tpu_custom_call.1} parent=0 // pred_check_branch
    %51 = sbr.rel (0) target = $region13
  $region12: #{tpu_custom_call.1} parent=0 // pred_region
    _
  $region13: #{tpu_custom_call.1} parent=0 // pred_fallthru
    _
  // Predicated region
  $region14: #{tpu_custom_call.1} parent=0 // pred_check
    _
  $region15: #{tpu_custom_call.1} parent=0 // pred_check_branch
    %53 = sbr.rel (0) target = $region17
  $region16: #{tpu_custom_call.1} parent=0 // pred_region
    _
  $region17: #{tpu_custom_call.1} parent=0 // pred_fallthru
    _

</llo_original>
